<compile_context>
chip_gen: v7x
topology: tpu7x:2x2x1
jax: 0.10.0
libtpu: 0.0.40
codegen_flags: <defaults>
</compile_context>

<pallas_src>
import math

import jax
import jax.numpy as jnp
from jax.experimental import pallas as pl
from jax.experimental.pallas import tpu as pltpu


def _round_up(x, m):
    return ((x + m - 1) // m) * m


def _cdiv(a, b):
    return (a + b - 1) // b


def _mh_sim_kernel(x1_ref, x2_ref, w1_ref, w2_ref, sm_ref, o_ref, acc_ref):
    p = pl.program_id(1)

    @pl.when(p == 0)
    def _init():
        acc_ref[...] = jnp.zeros_like(acc_ref)

    # Both projections for this row tile / projection chunk on the MXU,
    # f32 accumulation regardless of the input dtype.
    p1 = jnp.dot(x1_ref[...], w1_ref[...], preferred_element_type=jnp.float32)
    p2 = jnp.dot(x2_ref[...], w2_ref[...], preferred_element_type=jnp.float32)

    # Per-head (partial) reduction as a standard (tm,Pc)x(Pc,H) matmul against
    # the summing-matrix chunk: no transposed MXU operand, row-major result.
    acc_ref[...] += jnp.dot(p1 * p2, sm_ref[...],
                            preferred_element_type=jnp.float32)

    @pl.when(p == pl.num_programs(1) - 1)
    def _finalize():
        o_ref[...] = acc_ref[...].astype(o_ref.dtype)


def _chip_info():
    """(vmem_capacity_bytes, tensorcores_per_chip) with conservative fallbacks."""
    vmem = None
    try:
        vmem = int(pltpu.get_tpu_info().vmem_capacity_bytes)
    except Exception:
        vmem = None
    kind = ""
    try:
        kind = jax.devices()[0].device_kind.lower()
    except Exception:
        pass
    two_cores = "v7" in kind
    if vmem is None:
        vmem = (64 << 20) if two_cores else (128 << 20)
    if two_cores:
        vmem = min(vmem, 64 << 20)  # v7x VMEM is per-TensorCore
    return vmem, (2 if two_cores else 1)


def _vmem_estimate_bytes(tm, d1, d2, pc, h, in_bytes, out_bytes):
    lane = lambda v: _round_up(v, 128)
    sub = lambda v: _round_up(v, 8)
    est = 2 * sub(tm) * (lane(d1) + lane(d2)) * in_bytes      # x tiles (double-buffered)
    est += 2 * (sub(d1) + sub(d2)) * lane(pc) * in_bytes      # weight chunks (assume 2 bufs)
    est += 2 * sub(pc) * lane(h) * 4                          # summing-matrix chunk
    est += 2 * sub(tm) * lane(h) * out_bytes                  # output tile
    est += sub(tm) * lane(h) * 4                              # f32 accumulator scratch
    est += 4 * sub(tm) * lane(pc) * 4                         # p1/p2/prod/partial temporaries
    return est


def _select_tiles(n_rows, d1, d2, p, h, in_bytes, out_bytes, budget, cores,
                  target_rows):
    # Ragged-balanced row tile: padding waste < one tile and it is never
    # materialized in HBM (Pallas masks the boundary block).
    n_splits = max(1, _cdiv(n_rows, target_rows))
    rows_per = _cdiv(n_rows, n_splits)
    align = 128 if rows_per >= 128 else 8
    tm = min(_round_up(rows_per, align), _round_up(n_rows, 8))
    # Keep >= 2 row steps only on 2-TensorCore chips (v7x); on v5e/v6e a split
    # just adds per-step pipeline overhead with no parallelism gain.
    if cores >= 2 and n_rows > 256 and _cdiv(n_rows, tm) < 2:
        tm = max(128, _round_up(_cdiv(n_rows, 2), 128))

    pc = p  # projection-dim chunk; pc == P means weights resident, fetched once

    def est(tm_, pc_):
        return _vmem_estimate_bytes(tm_, d1, d2, pc_, h, in_bytes, out_bytes)

    # Prefer shrinking tm before chunking P: chunked weights are re-fetched
    # once per row tile, unchunked weights are fetched exactly once.
    while est(tm, pc) > budget and tm > 256:
        tm = max(256, _round_up(tm // 2, 128))
    while est(tm, pc) > budget and pc > 128 and pc % 256 == 0:
        pc //= 2
    while est(tm, pc) > budget and tm > 128:
        tm = max(128, _round_up(tm // 2, 8))
    # TODO(synk): D1/D2 themselves are not tiled; a pathological D*P that still
    # exceeds the budget after the shrinks above relies on the raised vmem_limit.
    return tm, pc


def multi_headed_similarity(tensor_1, tensor_2, w1, w2, num_heads, *,
                            scale_output=False, target_tile_rows=None):
    """tensor_1: [..., D1], tensor_2: [..., D2] -> [..., num_heads]."""
    *lead, D1 = tensor_1.shape
    D2 = tensor_2.shape[-1]
    assert tuple(tensor_2.shape[:-1]) == tuple(lead)
    P1, P2 = w1.shape[1], w2.shape[1]
    assert w1.shape[0] == D1 and w2.shape[0] == D2
    assert P1 % num_heads == 0 and P2 % num_heads == 0
    assert P1 // num_heads == P2 // num_heads, "head dims must match for dot similarity"
    P = P1
    head_dim = P // num_heads

    out_dtype = jnp.result_type(tensor_1.dtype, tensor_2.dtype, w1.dtype)

    N = 1
    for s in lead:
        N *= s
    x1 = tensor_1.reshape(N, D1)
    x2 = tensor_2.reshape(N, D2)

    vmem_cap, cores = _chip_info()
    limit_cap = min(int(0.80 * vmem_cap), vmem_cap - (8 << 20))
    budget = int(0.70 * limit_cap)

    if target_tile_rows is None:
        # Bigger tiles amortize the ~600-cycle per-step overhead; worth it on
        # v7x (3.2 TB/s HBM) when the per-row payload (D1+D2) is small.
        target_tile_rows = 2048 if (cores >= 2 and (D1 + D2) <= 256) else 1024

    in_bytes = max(jnp.dtype(x1.dtype).itemsize, jnp.dtype(w1.dtype).itemsize)
    out_bytes = jnp.dtype(out_dtype).itemsize
    tm, pc = _select_tiles(N, D1, D2, P, num_heads, in_bytes, out_bytes,
                           budget, cores, target_tile_rows)
    num_row_tiles = _cdiv(N, tm)
    n_p = P // pc

    est = _vmem_estimate_bytes(tm, D1, D2, pc, num_heads, in_bytes, out_bytes)
    vmem_limit = int(min(limit_cap, max(32 << 20, 2 * est)))

    # Per-head summing matrix (P, H): column h picks out head h's slice of the
    # projected product.  Built once in the wrapper; DotProductSimilarity's
    # optional scale_output folds into it for free.
    prj = jax.lax.broadcasted_iota(jnp.int32, (P, num_heads), 0)
    hd = jax.lax.broadcasted_iota(jnp.int32, (P, num_heads), 1)
    scale = (1.0 / math.sqrt(head_dim)) if scale_output else 1.0
    sum_mat = ((prj // head_dim) == hd).astype(jnp.float32) * scale

    def run(single_buffer_consts):
        const_kw = dict(pipeline_mode=pl.Buffered(1)) if single_buffer_consts else {}
        grid_spec = pltpu.PrefetchScalarGridSpec(
            num_scalar_prefetch=0,
            grid=(num_row_tiles, n_p),
            in_specs=[
                pl.BlockSpec((tm, D1), lambda i, p: (i, 0)),
                pl.BlockSpec((tm, D2), lambda i, p: (i, 0)),
                pl.BlockSpec((D1, pc), lambda i, p: (0, p), **const_kw),
                pl.BlockSpec((D2, pc), lambda i, p: (0, p), **const_kw),
                pl.BlockSpec((pc, num_heads), lambda i, p: (p, 0), **const_kw),
            ],
            out_specs=pl.BlockSpec((tm, num_heads), lambda i, p: (i, 0)),
            scratch_shapes=[pltpu.VMEM((tm, num_heads), jnp.float32)],
        )
        return pl.pallas_call(
            _mh_sim_kernel,
            out_shape=jax.ShapeDtypeStruct((N, num_heads), out_dtype),
            grid_spec=grid_spec,
            compiler_params=pltpu.CompilerParams(
                dimension_semantics=("parallel", "arbitrary"),
                vmem_limit_bytes=vmem_limit),
        )(x1, x2, w1, w2, sum_mat)

    # Single-buffer the constant-index operands (weights / summing matrix)
    # when P is unchunked; fall back to default buffering if rejected.
    single_buf = (n_p == 1) and hasattr(pl, "Buffered")
    try:
        out = run(single_buf)
    except Exception:
        if not single_buf:
            raise
        out = run(False)

    # Row-major (N, H) -> [..., H]: a free metadata reshape, no transpose pass.
    return out.reshape(*lead, num_heads)


def xavier_uniform(key, fan_in, fan_out, dtype=jnp.float32):
    bound = math.sqrt(6.0 / (fan_in + fan_out))
    return jax.random.uniform(key, (fan_in, fan_out), dtype=dtype,
                              minval=-bound, maxval=bound)


if __name__ == "__main__":
    # Module config (small, consistent with MultiHeadedSimilarity defaults):
    num_heads = 4
    tensor_1_dim = 32
    tensor_1_projected_dim = 32   # defaults to tensor_1_dim
    tensor_2_dim = 32             # defaults to tensor_1_dim
    tensor_2_projected_dim = 32   # defaults to tensor_2_dim

    B, S = 2, 8

    key = jax.random.PRNGKey(0)
    k1, k2, k3, k4 = jax.random.split(key, 4)

    # Deterministic parameter init (xavier_uniform, as in reset_parameters()).
    w1 = xavier_uniform(k1, tensor_1_dim, tensor_1_projected_dim)
    w2 = xavier_uniform(k2, tensor_2_dim, tensor_2_projected_dim)

    tensor_1 = jax.random.normal(k3, (B, S, tensor_1_dim), dtype=jnp.float32)
    tensor_2 = jax.random.normal(k4, (B, S, tensor_2_dim), dtype=jnp.float32)

    out = multi_headed_similarity(tensor_1, tensor_2, w1, w2, num_heads)
    out = jax.block_until_ready(out)

    # Pure-JAX reference for sanity.
    p1 = tensor_1 @ w1
    p2 = tensor_2 @ w2
    ref = (p1.reshape(B, S, num_heads, -1) * p2.reshape(B, S, num_heads, -1)).sum(-1)
    assert out.shape == (B, S, num_heads)
    assert jnp.allclose(out, ref, atol=2e-2, rtol=2e-2), \
        float(jnp.max(jnp.abs(out - ref)))

    print("KERNEL_OK")
</pallas_src>

<mosaic_0001>
module attributes {stable_mosaic.version = 11 : i64} {
  func.func @_mh_sim_kernel(%arg0: i32, %arg1: i32, %arg2: memref<16x32xf32, #tpu.memory_space<vmem>>, %arg3: memref<16x32xf32, #tpu.memory_space<vmem>>, %arg4: memref<32x32xf32, #tpu.memory_space<vmem>>, %arg5: memref<32x32xf32, #tpu.memory_space<vmem>>, %arg6: memref<32x4xf32, #tpu.memory_space<vmem>>, %arg7: memref<16x4xf32, #tpu.memory_space<vmem>>, %arg8: memref<16x4xf32, #tpu.memory_space<vmem>>) attributes {dimension_semantics = [#tpu.dimension_semantics<parallel>, #tpu.dimension_semantics<arbitrary>], iteration_bounds = array<i64: 1, 1>, scalar_prefetch = 0 : i64, scratch_operands = 1 : i64, tpu.core_type = #tpu.core_type<tc>, window_params = [{transform_indices = @transform_0, window_bounds = array<i64: 16, 32>}, {transform_indices = @transform_1, window_bounds = array<i64: 16, 32>}, {pipeline_mode = #tpu.pipeline_mode<synchronous>, transform_indices = @transform_2, window_bounds = array<i64: 32, 32>}, {pipeline_mode = #tpu.pipeline_mode<synchronous>, transform_indices = @transform_3, window_bounds = array<i64: 32, 32>}, {pipeline_mode = #tpu.pipeline_mode<synchronous>, transform_indices = @transform_4, window_bounds = array<i64: 32, 4>}, {transform_indices = @transform_5, window_bounds = array<i64: 16, 4>}]} {
    %c0_i32 = arith.constant 0 : i32
    %0 = arith.cmpi eq, %arg1, %c0_i32 : i32
    %1 = arith.extui %0 : i1 to i32
    %c0_i32_0 = arith.constant 0 : i32
    %2 = arith.cmpi ne, %1, %c0_i32_0 : i32
    scf.if %2 {
      %cst_18 = arith.constant 0.000000e+00 : f32
      %18 = vector.broadcast %cst_18 : f32 to vector<16x4xf32>
      %c0_19 = arith.constant 0 : index
      %c0_20 = arith.constant 0 : index
      %19 = vector.load %arg8[%c0_19, %c0_20] : memref<16x4xf32, #tpu.memory_space<vmem>>, vector<16x4xf32>
      tpu.vector_store %arg8[%c0_19, %c0_20], %18 {strides = array<i32>} : memref<16x4xf32, #tpu.memory_space<vmem>>, vector<16x4xf32>,
    } else {
    }
    %c0 = arith.constant 0 : index
    %c0_1 = arith.constant 0 : index
    %3 = vector.load %arg2[%c0, %c0_1] : memref<16x32xf32, #tpu.memory_space<vmem>>, vector<16x32xf32>
    %c0_2 = arith.constant 0 : index
    %c0_3 = arith.constant 0 : index
    %4 = vector.load %arg4[%c0_2, %c0_3] : memref<32x32xf32, #tpu.memory_space<vmem>>, vector<32x32xf32>
    %cst = arith.constant dense<0.000000e+00> : vector<16x32xf32>
    %5 = tpu.matmul %3, %4, %cst {dimension_numbers = #tpu.dot_dimension_numbers<[1], [0], [0], [1], [0, 0, 1, 1], [], []>} : vector<16x32xf32>, vector<32x32xf32>, vector<16x32xf32> -> vector<16x32xf32>
    %c0_4 = arith.constant 0 : index
    %c0_5 = arith.constant 0 : index
    %6 = vector.load %arg3[%c0_4, %c0_5] : memref<16x32xf32, #tpu.memory_space<vmem>>, vector<16x32xf32>
    %c0_6 = arith.constant 0 : index
    %c0_7 = arith.constant 0 : index
    %7 = vector.load %arg5[%c0_6, %c0_7] : memref<32x32xf32, #tpu.memory_space<vmem>>, vector<32x32xf32>
    %cst_8 = arith.constant dense<0.000000e+00> : vector<16x32xf32>
    %8 = tpu.matmul %6, %7, %cst_8 {dimension_numbers = #tpu.dot_dimension_numbers<[1], [0], [0], [1], [0, 0, 1, 1], [], []>} : vector<16x32xf32>, vector<32x32xf32>, vector<16x32xf32> -> vector<16x32xf32>
    %c0_9 = arith.constant 0 : index
    %c0_10 = arith.constant 0 : index
    %9 = vector.load %arg8[%c0_9, %c0_10] : memref<16x4xf32, #tpu.memory_space<vmem>>, vector<16x4xf32>
    %10 = arith.mulf %5, %8 : vector<16x32xf32>
    %c0_11 = arith.constant 0 : index
    %c0_12 = arith.constant 0 : index
    %11 = vector.load %arg6[%c0_11, %c0_12] : memref<32x4xf32, #tpu.memory_space<vmem>>, vector<32x4xf32>
    %cst_13 = arith.constant dense<0.000000e+00> : vector<16x4xf32>
    %12 = tpu.matmul %10, %11, %cst_13 {dimension_numbers = #tpu.dot_dimension_numbers<[1], [0], [0], [1], [0, 0, 1, 1], [], []>} : vector<16x32xf32>, vector<32x4xf32>, vector<16x4xf32> -> vector<16x4xf32>
    %13 = arith.addf %9, %12 : vector<16x4xf32>
    %c0_14 = arith.constant 0 : index
    %c0_15 = arith.constant 0 : index
    %14 = vector.load %arg8[%c0_14, %c0_15] : memref<16x4xf32, #tpu.memory_space<vmem>>, vector<16x4xf32>
    tpu.vector_store %arg8[%c0_14, %c0_15], %13 {strides = array<i32>} : memref<16x4xf32, #tpu.memory_space<vmem>>, vector<16x4xf32>,
    %c0_i32_16 = arith.constant 0 : i32
    %15 = arith.cmpi eq, %arg1, %c0_i32_16 : i32
    %16 = arith.extui %15 : i1 to i32
    %c0_i32_17 = arith.constant 0 : i32
    %17 = arith.cmpi ne, %16, %c0_i32_17 : i32
    scf.if %17 {
      %c0_18 = arith.constant 0 : index
      %c0_19 = arith.constant 0 : index
      %18 = vector.load %arg8[%c0_18, %c0_19] : memref<16x4xf32, #tpu.memory_space<vmem>>, vector<16x4xf32>
      %c0_20 = arith.constant 0 : index
      %c0_21 = arith.constant 0 : index
      %19 = vector.load %arg7[%c0_20, %c0_21] : memref<16x4xf32, #tpu.memory_space<vmem>>, vector<16x4xf32>
      tpu.vector_store %arg7[%c0_20, %c0_21], %18 {strides = array<i32>} : memref<16x4xf32, #tpu.memory_space<vmem>>, vector<16x4xf32>,
    } else {
    }
    return
  }
  func.func @transform_0(%arg0: i32, %arg1: i32) -> (i32, i32) {
    %c0_i32 = arith.constant 0 : i32
    %c0_i32_0 = arith.constant 0 : i32
    return %arg0, %c0_i32 : i32, i32
  }
  func.func @transform_1(%arg0: i32, %arg1: i32) -> (i32, i32) {
    %c0_i32 = arith.constant 0 : i32
    %c0_i32_0 = arith.constant 0 : i32
    return %arg0, %c0_i32 : i32, i32
  }
  func.func @transform_2(%arg0: i32, %arg1: i32) -> (i32, i32) {
    %c0_i32 = arith.constant 0 : i32
    %c0_i32_0 = arith.constant 0 : i32
    return %c0_i32, %arg1 : i32, i32
  }
  func.func @transform_3(%arg0: i32, %arg1: i32) -> (i32, i32) {
    %c0_i32 = arith.constant 0 : i32
    %c0_i32_0 = arith.constant 0 : i32
    return %c0_i32, %arg1 : i32, i32
  }
  func.func @transform_4(%arg0: i32, %arg1: i32) -> (i32, i32) {
    %c0_i32 = arith.constant 0 : i32
    %c0_i32_0 = arith.constant 0 : i32
    return %arg1, %c0_i32 : i32, i32
  }
  func.func @transform_5(%arg0: i32, %arg1: i32) -> (i32, i32) {
    %c0_i32 = arith.constant 0 : i32
    %c0_i32_0 = arith.constant 0 : i32
    return %arg0, %c0_i32 : i32, i32
  }
}

module attributes {stable_mosaic.version = 11 : i64} {
  func.func @_mh_sim_kernel(%arg0: i32, %arg1: i32, %arg2: memref<16x32xf32, #tpu.memory_space<vmem>>, %arg3: memref<16x32xf32, #tpu.memory_space<vmem>>, %arg4: memref<32x32xf32, #tpu.memory_space<vmem>>, %arg5: memref<32x32xf32, #tpu.memory_space<vmem>>, %arg6: memref<32x4xf32, #tpu.memory_space<vmem>>, %arg7: memref<16x4xf32, #tpu.memory_space<vmem>>, %arg8: memref<16x4xf32, #tpu.memory_space<vmem>>) attributes {dimension_semantics = [#tpu.dimension_semantics<parallel>, #tpu.dimension_semantics<arbitrary>], iteration_bounds = array<i64: 1, 1>, scalar_prefetch = 0 : i64, scratch_operands = 1 : i64, tpu.core_type = #tpu.core_type<tc>, window_params = [{transform_indices = @transform_0, window_bounds = array<i64: 16, 32>}, {transform_indices = @transform_1, window_bounds = array<i64: 16, 32>}, {transform_indices = @transform_2, window_bounds = array<i64: 32, 32>}, {transform_indices = @transform_3, window_bounds = array<i64: 32, 32>}, {transform_indices = @transform_4, window_bounds = array<i64: 32, 4>}, {transform_indices = @transform_5, window_bounds = array<i64: 16, 4>}]} {
    %c0_i32 = arith.constant 0 : i32
    %0 = arith.cmpi eq, %arg1, %c0_i32 : i32
    %1 = arith.extui %0 : i1 to i32
    %c0_i32_0 = arith.constant 0 : i32
    %2 = arith.cmpi ne, %1, %c0_i32_0 : i32
    scf.if %2 {
      %cst_18 = arith.constant 0.000000e+00 : f32
      %18 = vector.broadcast %cst_18 : f32 to vector<16x4xf32>
      %c0_19 = arith.constant 0 : index
      %c0_20 = arith.constant 0 : index
      %19 = vector.load %arg8[%c0_19, %c0_20] : memref<16x4xf32, #tpu.memory_space<vmem>>, vector<16x4xf32>
      tpu.vector_store %arg8[%c0_19, %c0_20], %18 {strides = array<i32>} : memref<16x4xf32, #tpu.memory_space<vmem>>, vector<16x4xf32>,
    } else {
    }
    %c0 = arith.constant 0 : index
    %c0_1 = arith.constant 0 : index
    %3 = vector.load %arg2[%c0, %c0_1] : memref<16x32xf32, #tpu.memory_space<vmem>>, vector<16x32xf32>
    %c0_2 = arith.constant 0 : index
    %c0_3 = arith.constant 0 : index
    %4 = vector.load %arg4[%c0_2, %c0_3] : memref<32x32xf32, #tpu.memory_space<vmem>>, vector<32x32xf32>
    %cst = arith.constant dense<0.000000e+00> : vector<16x32xf32>
    %5 = tpu.matmul %3, %4, %cst {dimension_numbers = #tpu.dot_dimension_numbers<[1], [0], [0], [1], [0, 0, 1, 1], [], []>} : vector<16x32xf32>, vector<32x32xf32>, vector<16x32xf32> -> vector<16x32xf32>
    %c0_4 = arith.constant 0 : index
    %c0_5 = arith.constant 0 : index
    %6 = vector.load %arg3[%c0_4, %c0_5] : memref<16x32xf32, #tpu.memory_space<vmem>>, vector<16x32xf32>
    %c0_6 = arith.constant 0 : index
    %c0_7 = arith.constant 0 : index
    %7 = vector.load %arg5[%c0_6, %c0_7] : memref<32x32xf32, #tpu.memory_space<vmem>>, vector<32x32xf32>
    %cst_8 = arith.constant dense<0.000000e+00> : vector<16x32xf32>
    %8 = tpu.matmul %6, %7, %cst_8 {dimension_numbers = #tpu.dot_dimension_numbers<[1], [0], [0], [1], [0, 0, 1, 1], [], []>} : vector<16x32xf32>, vector<32x32xf32>, vector<16x32xf32> -> vector<16x32xf32>
    %c0_9 = arith.constant 0 : index
    %c0_10 = arith.constant 0 : index
    %9 = vector.load %arg8[%c0_9, %c0_10] : memref<16x4xf32, #tpu.memory_space<vmem>>, vector<16x4xf32>
    %10 = arith.mulf %5, %8 : vector<16x32xf32>
    %c0_11 = arith.constant 0 : index
    %c0_12 = arith.constant 0 : index
    %11 = vector.load %arg6[%c0_11, %c0_12] : memref<32x4xf32, #tpu.memory_space<vmem>>, vector<32x4xf32>
    %cst_13 = arith.constant dense<0.000000e+00> : vector<16x4xf32>
    %12 = tpu.matmul %10, %11, %cst_13 {dimension_numbers = #tpu.dot_dimension_numbers<[1], [0], [0], [1], [0, 0, 1, 1], [], []>} : vector<16x32xf32>, vector<32x4xf32>, vector<16x4xf32> -> vector<16x4xf32>
    %13 = arith.addf %9, %12 : vector<16x4xf32>
    %c0_14 = arith.constant 0 : index
    %c0_15 = arith.constant 0 : index
    %14 = vector.load %arg8[%c0_14, %c0_15] : memref<16x4xf32, #tpu.memory_space<vmem>>, vector<16x4xf32>
    tpu.vector_store %arg8[%c0_14, %c0_15], %13 {strides = array<i32>} : memref<16x4xf32, #tpu.memory_space<vmem>>, vector<16x4xf32>,
    %c0_i32_16 = arith.constant 0 : i32
    %15 = arith.cmpi eq, %arg1, %c0_i32_16 : i32
    %16 = arith.extui %15 : i1 to i32
    %c0_i32_17 = arith.constant 0 : i32
    %17 = arith.cmpi ne, %16, %c0_i32_17 : i32
    scf.if %17 {
      %c0_18 = arith.constant 0 : index
      %c0_19 = arith.constant 0 : index
      %18 = vector.load %arg8[%c0_18, %c0_19] : memref<16x4xf32, #tpu.memory_space<vmem>>, vector<16x4xf32>
      %c0_20 = arith.constant 0 : index
      %c0_21 = arith.constant 0 : index
      %19 = vector.load %arg7[%c0_20, %c0_21] : memref<16x4xf32, #tpu.memory_space<vmem>>, vector<16x4xf32>
      tpu.vector_store %arg7[%c0_20, %c0_21], %18 {strides = array<i32>} : memref<16x4xf32, #tpu.memory_space<vmem>>, vector<16x4xf32>,
    } else {
    }
    return
  }
  func.func @transform_0(%arg0: i32, %arg1: i32) -> (i32, i32) {
    %c0_i32 = arith.constant 0 : i32
    %c0_i32_0 = arith.constant 0 : i32
    return %arg0, %c0_i32 : i32, i32
  }
  func.func @transform_1(%arg0: i32, %arg1: i32) -> (i32, i32) {
    %c0_i32 = arith.constant 0 : i32
    %c0_i32_0 = arith.constant 0 : i32
    return %arg0, %c0_i32 : i32, i32
  }
  func.func @transform_2(%arg0: i32, %arg1: i32) -> (i32, i32) {
    %c0_i32 = arith.constant 0 : i32
    %c0_i32_0 = arith.constant 0 : i32
    return %c0_i32, %arg1 : i32, i32
  }
  func.func @transform_3(%arg0: i32, %arg1: i32) -> (i32, i32) {
    %c0_i32 = arith.constant 0 : i32
    %c0_i32_0 = arith.constant 0 : i32
    return %c0_i32, %arg1 : i32, i32
  }
  func.func @transform_4(%arg0: i32, %arg1: i32) -> (i32, i32) {
    %c0_i32 = arith.constant 0 : i32
    %c0_i32_0 = arith.constant 0 : i32
    return %arg1, %c0_i32 : i32, i32
  }
  func.func @transform_5(%arg0: i32, %arg1: i32) -> (i32, i32) {
    %c0_i32 = arith.constant 0 : i32
    %c0_i32_0 = arith.constant 0 : i32
    return %arg0, %c0_i32 : i32, i32
  }
}

</mosaic_0001>

<llo_original>
// kernel: tpu_custom_call.1
$region0: #{tpu_custom_call.1}
  #allocation0 [shape = 'u32[]', space=smem, size = 0x4, offset = 0x4, fixed_abs, tag = 'smem constant byte address 0x4 - core index']
  #allocation1 [shape = 'u32[144,128]{1,0:T(1,128)}', space=vmem, size = 0x12000, scoped, tag = 'internal scratch']
  #allocation2 [shape = 'f32[16,4]{1,0:T(8,128)}', space=vmem, size = 0x2000, scoped, tag = 'scratch operand']
  %s0 = inlined_call_operand.hbm [shape: f32[16,32], index: 0, kind: input, shape index: {}]
  %s1 = inlined_call_operand.hbm [shape: f32[16,32], index: 1, kind: input, shape index: {}]
  %s2 = inlined_call_operand.vmem [shape: f32[32,32], index: 2, kind: input, shape index: {}]
  %s3 = inlined_call_operand.hbm [shape: f32[32,32], index: 3, kind: input, shape index: {}]
  %s4 = inlined_call_operand.vmem [shape: f32[32,4], index: 4, kind: input, shape index: {}]
  %s5 = inlined_call_operand.vmem [shape: f32[16,4], index: 5, kind: output, shape index: {}]
  %s6 = sld [smem:[#allocation0]]
  $region50: #{tpu_custom_call.1} parent=0
    _
  %s8 = ssub.s32 1, %s6
  %s9 = scalar_select 0, %s8, %s6
  $region1: #{tpu_custom_call.1} parent=0
    #allocation3 [shape = 'u8[8192]{0}', space=vmem, size = 0x2000, scoped, tag = 'input window, operand 0, single buffered']
    #allocation4 [shape = 's32[1]{0}', space=sflag, size = 0x4, scoped, tag = 'scoped memory for tpu_custom_call.1']
    #allocation5 [shape = 'u8[8192]{0}', space=vmem, size = 0x2000, scoped, tag = 'input window, operand 1, single buffered']
    #allocation6 [shape = 's32[1]{0}', space=sflag, size = 0x4, scoped, tag = 'scoped memory for tpu_custom_call.1']
    #allocation7 [shape = 'u8[16384]{0}', space=vmem, size = 0x4000, scoped, tag = 'input window, operand 3, single buffered']
    %10 = vsyncpa [#allocation4], 0
    %11 = vsyncpa [#allocation6], 0
    // Predicated region
    $region2: #{tpu_custom_call.1} parent=1 // pred_check
      _
    $region3: #{tpu_custom_call.1} parent=1 // pred_check_branch
      %13 = sbr.rel (0) target = $region5
    $region4: #{tpu_custom_call.1} parent=1 // pred_region
      %s15 = ssub.s32 256, 256
      %16 = vsyncadd [#allocation4], %s15
      %s17 = sshll.u32 [#allocation3], 4
      %s18 = int_to_ptr.vmem [resolvable:$true] %s17
      %23 = dma.hbm_to_vmem [thread:$0]  %s0, 256, %s18, [#allocation4], 128, 128, 8
    $region5: #{tpu_custom_call.1} parent=1 // pred_fallthru
      _
    // Predicated region
    $region6: #{tpu_custom_call.1} parent=1 // pred_check
      _
    $region7: #{tpu_custom_call.1} parent=1 // pred_check_branch
      %25 = sbr.rel (0) target = $region9
    $region8: #{tpu_custom_call.1} parent=1 // pred_region
      %s27 = ssub.s32 256, 256
      %28 = vsyncadd [#allocation6], %s27
      %s29 = sshll.u32 [#allocation5], 4
      %s30 = int_to_ptr.vmem [resolvable:$true] %s29
      %35 = dma.hbm_to_vmem [thread:$0]  %s1, 256, %s30, [#allocation6], 128, 128, 8
    $region9: #{tpu_custom_call.1} parent=1 // pred_fallthru
      _
    // Predicated region
    $region10: #{tpu_custom_call.1} parent=1 // pred_check
      _
    $region11: #{tpu_custom_call.1} parent=1 // pred_check_branch
      %37 = sbr.rel (0) target = $region13
    $region12: #{tpu_custom_call.1} parent=1 // pred_region
      _
    $region13: #{tpu_custom_call.1} parent=1 // pred_fallthru
      _
    // Predicated region
    $region14: #{tpu_custom_call.1} parent=1 // pred_check
      _
    $region15: #{tpu_custom_call.1} parent=1 // pred_check_branch
      %39 = sbr.rel (0) target = $region17
    $region16: #{tpu_custom_call.1} parent=1 // pred_region
      %s41 = ssub.s32 512, 512
      %42 = vsyncadd [#allocation6], %s41
      %s43 = sshll.u32 [#allocation7], 4
      %s44 = int_to_ptr.vmem [resolvable:$true] %s43
      %49 = dma.hbm_to_vmem [thread:$0]  %s3, 512, %s44, [#allocation6], 128, 128, 8
    $region17: #{tpu_custom_call.1} parent=1 // pred_fallthru
      _
    // Predicated region
    $region18: #{tpu_custom_call.1} parent=1 // pred_check
      _
    $region19: #{tpu_custom_call.1} parent=1 // pred_check_branch
      %51 = sbr.rel (0) target = $region21
    $region20: #{tpu_custom_call.1} parent=1 // pred_region
      _
    $region21: #{tpu_custom_call.1} parent=1 // pred_fallthru
      _
    // Predicated region
    $region22: #{tpu_custom_call.1} parent=1 // pred_check
      _
    $region23: #{tpu_custom_call.1} parent=1 // pred_check_branch
      %53 = sbr.rel (0) target = $region25
    $region24: #{tpu_custom_call.1} parent=1 // pred_region
      %54 = dma.done [#allocation4], 256
    $region25: #{tpu_custom_call.1} parent=1 // pred_fallthru
      _
    // Predicated region
    $region26: #{tpu_custom_call.1} parent=1 // pred_check
      _
    $region27: #{tpu_custom_call.1} parent=1 // pred_check_branch
      %56 = sbr.rel (0) target = $region29
    $region28: #{tpu_custom_call.1} parent=1 // pred_region
      %57 = dma.done [#allocation6], 256
    $region29: #{tpu_custom_call.1} parent=1 // pred_fallthru
      _
    // Predicated region
    $region30: #{tpu_custom_call.1} parent=1 // pred_check
      _
    $region31: #{tpu_custom_call.1} parent=1 // pred_check_branch
      %59 = sbr.rel (0) target = $region33
    $region32: #{tpu_custom_call.1} parent=1 // pred_region
      %60 = dma.done [#allocation6], 512
    $region33: #{tpu_custom_call.1} parent=1 // pred_fallthru
      _
    %p61 = scmp.eq.s32.totalorder 0, 0
    // Predicated region
    $region34: #{tpu_custom_call.1} parent=1 // pred_check
      %p62 = pneg %p61
    $region35: #{tpu_custom_call.1} parent=1 // pred_check_branch
      %64 = sbr.rel (%p62) target = $region37
    $region36: #{tpu_custom_call.1} parent=1 // pred_region
      %vm65 = vcmask 31744
      %66 = vst.msk [vmem:[#allocation2] sm:$0xff] %vm65, 0.0
      %67 = vst.msk [vmem:[#allocation2 + $0x8] sm:$0xff] %vm65, 0.0
    $region37: #{tpu_custom_call.1} parent=1 // pred_fallthru
      _
    %v68 = vld [vmem:[#allocation3] sm:$0xff]
    %v69 = vld [vmem:[#allocation3 + $0x8] sm:$0xff]
    %v70 = vld [vmem:[%s2] sm:$0xff]
    %v71 = vld [vmem:[%s2 + $0x8] sm:$0xff]
    %v72 = vld [vmem:[%s2 + $0x10] sm:$0xff]
    %v73 = vld [vmem:[%s2 + $0x18] sm:$0xff]
    %vm74 = vcmask 261120
    %v76 = vsel %vm74, %v68, 0
    %v79 = vsel %vm74, %v69, 0
    %81 = vmatprep.subr.mxu0 0.0
    %82 = vmatpush1.msra.mxu0 %v70
    %83 = vmatprep.subr.mxu0 0.0
    %84 = vmatpush1.msra.mxu0 %v71
    %85 = vmatprep.subr.mxu0 0.0
    %86 = vmatpush1.msra.mxu0 %v72
    %87 = vmatprep.subr.mxu0 0.0
    %88 = vmatpush1.msra.mxu0 %v73
    %89 = vmatprep.subr.mxu0 0.0
    %90 = vmatpush1.msra.mxu0 0.0
    %91 = vmatprep.subr.mxu0 0.0
    %92 = vmatpush1.msra.mxu0 0.0
    %93 = vmatprep.subr.mxu0 0.0
    %94 = vmatpush1.msra.mxu0 0.0
    %95 = vmatprep.subr.mxu0 0.0
    %96 = vmatpush1.msra.mxu0 0.0
    %97 = vmatprep.subr.mxu0 0.0
    %98 = vmatpush1.msra.mxu0 0.0
    %99 = vmatprep.subr.mxu0 0.0
    %100 = vmatpush1.msra.mxu0 0.0
    %101 = vmatprep.subr.mxu0 0.0
    %102 = vmatpush1.msra.mxu0 0.0
    %103 = vmatprep.subr.mxu0 0.0
    %104 = vmatpush1.msra.mxu0 0.0
    %105 = vmatprep.subr.mxu0 0.0
    %106 = vmatpush1.msra.mxu0 0.0
    %107 = vmatprep.subr.mxu0 0.0
    %108 = vmatpush1.msra.mxu0 0.0
    %109 = vmatprep.subr.mxu0 0.0
    %110 = vmatpush1.msra.mxu0 0.0
    %111 = vmatprep.subr.mxu0 0.0
    %112 = vmatpush1.msra.mxu0 0.0
    %113 = vmatprep.subr.mxu0 0.0
    %114 = vmatpush1.msra.mxu0 0.0
    %115 = vmatprep.subr.mxu0 0.0
    %116 = vmatpush1.msra.mxu0 0.0
    %117 = vmatprep.subr.mxu0 0.0
    %118 = vmatpush1.msra.mxu0 0.0
    %119 = vmatprep.subr.mxu0 0.0
    %120 = vmatpush1.msra.mxu0 0.0
    %121 = vmatprep.subr.mxu0 0.0
    %122 = vmatpush1.msra.mxu0 0.0
    %123 = vmatprep.subr.mxu0 0.0
    %124 = vmatpush1.msra.mxu0 0.0
    %125 = vmatprep.subr.mxu0 0.0
    %126 = vmatpush1.msra.mxu0 0.0
    %127 = vmatprep.subr.mxu0 0.0
    %128 = vmatpush1.msra.mxu0 0.0
    %129 = vmatprep.subr.mxu0 0.0
    %130 = vmatpush1.msra.mxu0 0.0
    %131 = vmatprep.subr.mxu0 0.0
    %132 = vmatpush1.msra.mxu0 0.0
    %133 = vmatprep.subr.mxu0 0.0
    %134 = vmatpush1.msra.mxu0 0.0
    %135 = vmatprep.subr.mxu0 0.0
    %136 = vmatpush1.msra.mxu0 0.0
    %137 = vmatprep.subr.mxu0 0.0
    %138 = vmatpush1.msra.mxu0 0.0
    %139 = vmatprep.subr.mxu0 0.0
    %140 = vmatpush1.msra.mxu0 0.0
    %141 = vmatprep.subr.mxu0 0.0
    %142 = vmatpush1.msra.mxu0 0.0
    %143 = vmatprep.subr.mxu0 0.0
    %144 = vmatpush1.msra.mxu0 0.0
    %145 = vmatprep.mubr.f32.mxu0 0.0
    %146 = vmatmul.mubr.f32.gmra.mrb[0].mxu0 %v76
    %v147 = vpop.f32.mrb[0].mxu0
    %v148 = vadd.f32 0.0, %v147
    %v149 = vpop.f32.mrb[0].mxu0
    %150 = vmatprep.mubr.f32.mxu0 0.0
    %151 = vmatmul.mubr.f32.gmra.mrb[0].mxu0 %v79
    %v152 = vpop.f32.mrb[0].mxu0
    %v153 = vadd.f32 0.0, %v152
    %v154 = vpop.f32.mrb[0].mxu0
    %155 = vdwg.mxu0
    %v156 = vld [vmem:[#allocation5] sm:$0xff]
    %v157 = vld [vmem:[#allocation5 + $0x8] sm:$0xff]
    %v158 = vld [vmem:[#allocation7] sm:$0xff]
    %v159 = vld [vmem:[#allocation7 + $0x8] sm:$0xff]
    %v160 = vld [vmem:[#allocation7 + $0x10] sm:$0xff]
    %v161 = vld [vmem:[#allocation7 + $0x18] sm:$0xff]
    %v163 = vsel %vm74, %v156, 0
    %v166 = vsel %vm74, %v157, 0
    %168 = vmatprep.subr.mxu0 0.0
    %169 = vmatpush1.msra.mxu0 %v158
    %170 = vmatprep.subr.mxu0 0.0
    %171 = vmatpush1.msra.mxu0 %v159
    %172 = vmatprep.subr.mxu0 0.0
    %173 = vmatpush1.msra.mxu0 %v160
    %174 = vmatprep.subr.mxu0 0.0
    %175 = vmatpush1.msra.mxu0 %v161
    %176 = vmatprep.subr.mxu0 0.0
    %177 = vmatpush1.msra.mxu0 0.0
    %178 = vmatprep.subr.mxu0 0.0
    %179 = vmatpush1.msra.mxu0 0.0
    %180 = vmatprep.subr.mxu0 0.0
    %181 = vmatpush1.msra.mxu0 0.0
    %182 = vmatprep.subr.mxu0 0.0
    %183 = vmatpush1.msra.mxu0 0.0
    %184 = vmatprep.subr.mxu0 0.0
    %185 = vmatpush1.msra.mxu0 0.0
    %186 = vmatprep.subr.mxu0 0.0
    %187 = vmatpush1.msra.mxu0 0.0
    %188 = vmatprep.subr.mxu0 0.0
    %189 = vmatpush1.msra.mxu0 0.0
    %190 = vmatprep.subr.mxu0 0.0
    %191 = vmatpush1.msra.mxu0 0.0
    %192 = vmatprep.subr.mxu0 0.0
    %193 = vmatpush1.msra.mxu0 0.0
    %194 = vmatprep.subr.mxu0 0.0
    %195 = vmatpush1.msra.mxu0 0.0
    %196 = vmatprep.subr.mxu0 0.0
    %197 = vmatpush1.msra.mxu0 0.0
    %198 = vmatprep.subr.mxu0 0.0
    %199 = vmatpush1.msra.mxu0 0.0
    %200 = vmatprep.subr.mxu0 0.0
    %201 = vmatpush1.msra.mxu0 0.0
    %202 = vmatprep.subr.mxu0 0.0
    %203 = vmatpush1.msra.mxu0 0.0
    %204 = vmatprep.subr.mxu0 0.0
    %205 = vmatpush1.msra.mxu0 0.0
    %206 = vmatprep.subr.mxu0 0.0
    %207 = vmatpush1.msra.mxu0 0.0
    %208 = vmatprep.subr.mxu0 0.0
    %209 = vmatpush1.msra.mxu0 0.0
    %210 = vmatprep.subr.mxu0 0.0
    %211 = vmatpush1.msra.mxu0 0.0
    %212 = vmatprep.subr.mxu0 0.0
    %213 = vmatpush1.msra.mxu0 0.0
    %214 = vmatprep.subr.mxu0 0.0
    %215 = vmatpush1.msra.mxu0 0.0
    %216 = vmatprep.subr.mxu0 0.0
    %217 = vmatpush1.msra.mxu0 0.0
    %218 = vmatprep.subr.mxu0 0.0
    %219 = vmatpush1.msra.mxu0 0.0
    %220 = vmatprep.subr.mxu0 0.0
    %221 = vmatpush1.msra.mxu0 0.0
    %222 = vmatprep.subr.mxu0 0.0
    %223 = vmatpush1.msra.mxu0 0.0
    %224 = vmatprep.subr.mxu0 0.0
    %225 = vmatpush1.msra.mxu0 0.0
    %226 = vmatprep.subr.mxu0 0.0
    %227 = vmatpush1.msra.mxu0 0.0
    %228 = vmatprep.subr.mxu0 0.0
    %229 = vmatpush1.msra.mxu0 0.0
    %230 = vmatprep.subr.mxu0 0.0
    %231 = vmatpush1.msra.mxu0 0.0
    %232 = vmatprep.mubr.f32.mxu0 0.0
    %233 = vmatmul.mubr.f32.gmra.mrb[0].mxu0 %v163
    %v234 = vpop.f32.mrb[0].mxu0
    %v235 = vadd.f32 0.0, %v234
    %v236 = vpop.f32.mrb[0].mxu0
    %237 = vmatprep.mubr.f32.mxu0 0.0
    %238 = vmatmul.mubr.f32.gmra.mrb[0].mxu0 %v166
    %v239 = vpop.f32.mrb[0].mxu0
    %v240 = vadd.f32 0.0, %v239
    %v241 = vpop.f32.mrb[0].mxu0
    %242 = vdwg.mxu0
    %v243 = vld [vmem:[#allocation2] sm:$0xff]
    %v244 = vld [vmem:[#allocation2 + $0x8] sm:$0xff]
    %v245 = vmul.f32 %v148, %v235
    %v246 = vmul.f32 %v153, %v240
    %v247 = vld [vmem:[%s4] sm:$0xff]
    %v248 = vld [vmem:[%s4 + $0x8] sm:$0xff]
    %v249 = vld [vmem:[%s4 + $0x10] sm:$0xff]
    %v250 = vld [vmem:[%s4 + $0x18] sm:$0xff]
    %v252 = vsel %vm74, %v245, 0
    %v255 = vsel %vm74, %v246, 0
    %257 = vmatprep.subr.mxu0 0.0
    %258 = vmatpush1.msra.mxu0 %v247
    %259 = vmatprep.subr.mxu0 0.0
    %260 = vmatpush1.msra.mxu0 %v248
    %261 = vmatprep.subr.mxu0 0.0
    %262 = vmatpush1.msra.mxu0 %v249
    %263 = vmatprep.subr.mxu0 0.0
    %264 = vmatpush1.msra.mxu0 %v250
    %265 = vmatprep.subr.mxu0 0.0
    %266 = vmatpush1.msra.mxu0 0.0
    %267 = vmatprep.subr.mxu0 0.0
    %268 = vmatpush1.msra.mxu0 0.0
    %269 = vmatprep.subr.mxu0 0.0
    %270 = vmatpush1.msra.mxu0 0.0
    %271 = vmatprep.subr.mxu0 0.0
    %272 = vmatpush1.msra.mxu0 0.0
    %273 = vmatprep.subr.mxu0 0.0
    %274 = vmatpush1.msra.mxu0 0.0
    %275 = vmatprep.subr.mxu0 0.0
    %276 = vmatpush1.msra.mxu0 0.0
    %277 = vmatprep.subr.mxu0 0.0
    %278 = vmatpush1.msra.mxu0 0.0
    %279 = vmatprep.subr.mxu0 0.0
    %280 = vmatpush1.msra.mxu0 0.0
    %281 = vmatprep.subr.mxu0 0.0
    %282 = vmatpush1.msra.mxu0 0.0
    %283 = vmatprep.subr.mxu0 0.0
    %284 = vmatpush1.msra.mxu0 0.0
    %285 = vmatprep.subr.mxu0 0.0
    %286 = vmatpush1.msra.mxu0 0.0
    %287 = vmatprep.subr.mxu0 0.0
    %288 = vmatpush1.msra.mxu0 0.0
    %289 = vmatprep.subr.mxu0 0.0
    %290 = vmatpush1.msra.mxu0 0.0
    %291 = vmatprep.subr.mxu0 0.0
    %292 = vmatpush1.msra.mxu0 0.0
    %293 = vmatprep.subr.mxu0 0.0
    %294 = vmatpush1.msra.mxu0 0.0
    %295 = vmatprep.subr.mxu0 0.0
    %296 = vmatpush1.msra.mxu0 0.0
    %297 = vmatprep.subr.mxu0 0.0
    %298 = vmatpush1.msra.mxu0 0.0
    %299 = vmatprep.subr.mxu0 0.0
    %300 = vmatpush1.msra.mxu0 0.0
    %301 = vmatprep.subr.mxu0 0.0
    %302 = vmatpush1.msra.mxu0 0.0
    %303 = vmatprep.subr.mxu0 0.0
    %304 = vmatpush1.msra.mxu0 0.0
    %305 = vmatprep.subr.mxu0 0.0
    %306 = vmatpush1.msra.mxu0 0.0
    %307 = vmatprep.subr.mxu0 0.0
    %308 = vmatpush1.msra.mxu0 0.0
    %309 = vmatprep.subr.mxu0 0.0
    %310 = vmatpush1.msra.mxu0 0.0
    %311 = vmatprep.subr.mxu0 0.0
    %312 = vmatpush1.msra.mxu0 0.0
    %313 = vmatprep.subr.mxu0 0.0
    %314 = vmatpush1.msra.mxu0 0.0
    %315 = vmatprep.subr.mxu0 0.0
    %316 = vmatpush1.msra.mxu0 0.0
    %317 = vmatprep.subr.mxu0 0.0
    %318 = vmatpush1.msra.mxu0 0.0
    %319 = vmatprep.subr.mxu0 0.0
    %320 = vmatpush1.msra.mxu0 0.0
    %321 = vmatprep.mubr.f32.mxu0 0.0
    %322 = vmatmul.mubr.f32.gmra.mrb[0].mxu0 %v252
    %v323 = vpop.f32.mrb[0].mxu0
    %v324 = vadd.f32 0.0, %v323
    %v325 = vpop.f32.mrb[0].mxu0
    %326 = vmatprep.mubr.f32.mxu0 0.0
    %327 = vmatmul.mubr.f32.gmra.mrb[0].mxu0 %v255
    %v328 = vpop.f32.mrb[0].mxu0
    %v329 = vadd.f32 0.0, %v328
    %v330 = vpop.f32.mrb[0].mxu0
    %331 = vdwg.mxu0
    %v332 = vadd.f32 %v243, %v324
    %v333 = vadd.f32 %v244, %v329
    %vm334 = vcmask 31744
    %335 = vst.msk [vmem:[#allocation2] sm:$0xff] %vm334, %v332
    %336 = vst.msk [vmem:[#allocation2 + $0x8] sm:$0xff] %vm334, %v333
    // Predicated region
    $region38: #{tpu_custom_call.1} parent=1 // pred_check
      %p337 = pneg %p61
    $region39: #{tpu_custom_call.1} parent=1 // pred_check_branch
      %339 = sbr.rel (%p337) target = $region41
    $region40: #{tpu_custom_call.1} parent=1 // pred_region
      %v340 = vld [vmem:[#allocation2] sm:$0xff]
      %v341 = vld [vmem:[#allocation2 + $0x8] sm:$0xff]
      %342 = vst.msk [vmem:[%s5] sm:$0xff] %vm334, %v340
      %343 = vst.msk [vmem:[%s5 + $0x8] sm:$0xff] %vm334, %v341
    $region41: #{tpu_custom_call.1} parent=1 // pred_fallthru
      _
    // Predicated region
    $region42: #{tpu_custom_call.1} parent=1 // pred_check
      _
    $region43: #{tpu_custom_call.1} parent=1 // pred_check_branch
      %345 = sbr.rel (0) target = $region45
    $region44: #{tpu_custom_call.1} parent=1 // pred_region
      _
    $region45: #{tpu_custom_call.1} parent=1 // pred_fallthru
      _
    // Predicated region
    $region46: #{tpu_custom_call.1} parent=1 // pred_check
      _
    $region47: #{tpu_custom_call.1} parent=1 // pred_check_branch
      %347 = sbr.rel (0) target = $region49
    $region48: #{tpu_custom_call.1} parent=1 // pred_region
      _
    $region49: #{tpu_custom_call.1} parent=1 // pred_fallthru
      _
    %348 = vsyncpa [#allocation4], 1
    %349 = vsyncpa [#allocation6], 1

// kernel: tpu_custom_call.1
$region0: #{tpu_custom_call.1}
  #allocation0 [shape = 'u32[]', space=smem, size = 0x4, offset = 0x4, fixed_abs, tag = 'smem constant byte address 0x4 - core index']
  #allocation1 [shape = 'u32[144,128]{1,0:T(1,128)}', space=vmem, size = 0x12000, scoped, tag = 'internal scratch']
  #allocation2 [shape = 'f32[16,4]{1,0:T(8,128)}', space=vmem, size = 0x2000, scoped, tag = 'scratch operand']
  %s0 = inlined_call_operand.hbm [shape: f32[16,32], index: 0, kind: input, shape index: {}]
  %s1 = inlined_call_operand.hbm [shape: f32[16,32], index: 1, kind: input, shape index: {}]
  %s2 = inlined_call_operand.vmem [shape: f32[32,32], index: 2, kind: input, shape index: {}]
  %s3 = inlined_call_operand.hbm [shape: f32[32,32], index: 3, kind: input, shape index: {}]
  %s4 = inlined_call_operand.vmem [shape: f32[32,4], index: 4, kind: input, shape index: {}]
  %s5 = inlined_call_operand.vmem [shape: f32[16,4], index: 5, kind: output, shape index: {}]
  %s6 = sld [smem:[#allocation0]]
  $region50: #{tpu_custom_call.1} parent=0
    _
  %s8 = ssub.s32 1, %s6
  %s9 = scalar_select 0, %s8, %s6
  $region1: #{tpu_custom_call.1} parent=0
    #allocation3 [shape = 'u8[8192]{0}', space=vmem, size = 0x2000, scoped, tag = 'input window, operand 0, single buffered']
    #allocation4 [shape = 's32[1]{0}', space=sflag, size = 0x4, scoped, tag = 'scoped memory for tpu_custom_call.1']
    #allocation5 [shape = 'u8[8192]{0}', space=vmem, size = 0x2000, scoped, tag = 'input window, operand 1, single buffered']
    #allocation6 [shape = 's32[1]{0}', space=sflag, size = 0x4, scoped, tag = 'scoped memory for tpu_custom_call.1']
    #allocation7 [shape = 'u8[16384]{0}', space=vmem, size = 0x4000, scoped, tag = 'input window, operand 3, single buffered']
    %10 = vsyncpa [#allocation4], 0
    %11 = vsyncpa [#allocation6], 0
    // Predicated region
    $region2: #{tpu_custom_call.1} parent=1 // pred_check
      _
    $region3: #{tpu_custom_call.1} parent=1 // pred_check_branch
      %13 = sbr.rel (0) target = $region5
    $region4: #{tpu_custom_call.1} parent=1 // pred_region
      %s15 = ssub.s32 256, 256
      %16 = vsyncadd [#allocation4], %s15
      %s17 = sshll.u32 [#allocation3], 4
      %s18 = int_to_ptr.vmem [resolvable:$true] %s17
      %23 = dma.hbm_to_vmem [thread:$0]  %s0, 256, %s18, [#allocation4], 128, 128, 8
    $region5: #{tpu_custom_call.1} parent=1 // pred_fallthru
      _
    // Predicated region
    $region6: #{tpu_custom_call.1} parent=1 // pred_check
      _
    $region7: #{tpu_custom_call.1} parent=1 // pred_check_branch
      %25 = sbr.rel (0) target = $region9
    $region8: #{tpu_custom_call.1} parent=1 // pred_region
      %s27 = ssub.s32 256, 256
      %28 = vsyncadd [#allocation6], %s27
      %s29 = sshll.u32 [#allocation5], 4
      %s30 = int_to_ptr.vmem [resolvable:$true] %s29
      %35 = dma.hbm_to_vmem [thread:$0]  %s1, 256, %s30, [#allocation6], 128, 128, 8
    $region9: #{tpu_custom_call.1} parent=1 // pred_fallthru
      _
    // Predicated region
    $region10: #{tpu_custom_call.1} parent=1 // pred_check
      _
    $region11: #{tpu_custom_call.1} parent=1 // pred_check_branch
      %37 = sbr.rel (0) target = $region13
    $region12: #{tpu_custom_call.1} parent=1 // pred_region
      _
    $region13: #{tpu_custom_call.1} parent=1 // pred_fallthru
      _
    // Predicated region
    $region14: #{tpu_custom_call.1} parent=1 // pred_check
      _
    $region15: #{tpu_custom_call.1} parent=1 // pred_check_branch
      %39 = sbr.rel (0) target = $region17
    $region16: #{tpu_custom_call.1} parent=1 // pred_region
      %s41 = ssub.s32 512, 512
      %42 = vsyncadd [#allocation6], %s41
      %s43 = sshll.u32 [#allocation7], 4
      %s44 = int_to_ptr.vmem [resolvable:$true] %s43
      %49 = dma.hbm_to_vmem [thread:$0]  %s3, 512, %s44, [#allocation6], 128, 128, 8
    $region17: #{tpu_custom_call.1} parent=1 // pred_fallthru
      _
    // Predicated region
    $region18: #{tpu_custom_call.1} parent=1 // pred_check
      _
    $region19: #{tpu_custom_call.1} parent=1 // pred_check_branch
      %51 = sbr.rel (0) target = $region21
    $region20: #{tpu_custom_call.1} parent=1 // pred_region
      _
    $region21: #{tpu_custom_call.1} parent=1 // pred_fallthru
      _
    // Predicated region
    $region22: #{tpu_custom_call.1} parent=1 // pred_check
      _
    $region23: #{tpu_custom_call.1} parent=1 // pred_check_branch
      %53 = sbr.rel (0) target = $region25
    $region24: #{tpu_custom_call.1} parent=1 // pred_region
      %54 = dma.done [#allocation4], 256
    $region25: #{tpu_custom_call.1} parent=1 // pred_fallthru
      _
    // Predicated region
    $region26: #{tpu_custom_call.1} parent=1 // pred_check
      _
    $region27: #{tpu_custom_call.1} parent=1 // pred_check_branch
      %56 = sbr.rel (0) target = $region29
    $region28: #{tpu_custom_call.1} parent=1 // pred_region
      %57 = dma.done [#allocation6], 256
    $region29: #{tpu_custom_call.1} parent=1 // pred_fallthru
      _
    // Predicated region
    $region30: #{tpu_custom_call.1} parent=1 // pred_check
      _
    $region31: #{tpu_custom_call.1} parent=1 // pred_check_branch
      %59 = sbr.rel (0) target = $region33
    $region32: #{tpu_custom_call.1} parent=1 // pred_region
      %60 = dma.done [#allocation6], 512
    $region33: #{tpu_custom_call.1} parent=1 // pred_fallthru
      _
    %p61 = scmp.eq.s32.totalorder 0, 0
    // Predicated region
    $region34: #{tpu_custom_call.1} parent=1 // pred_check
      %p62 = pneg %p61
    $region35: #{tpu_custom_call.1} parent=1 // pred_check_branch
      %64 = sbr.rel (%p62) target = $region37
    $region36: #{tpu_custom_call.1} parent=1 // pred_region
      %vm65 = vcmask 31744
      %66 = vst.msk [vmem:[#allocation2] sm:$0xff] %vm65, 0.0
      %67 = vst.msk [vmem:[#allocation2 + $0x8] sm:$0xff] %vm65, 0.0
    $region37: #{tpu_custom_call.1} parent=1 // pred_fallthru
      _
    %v68 = vld [vmem:[#allocation3] sm:$0xff]
    %v69 = vld [vmem:[#allocation3 + $0x8] sm:$0xff]
    %v70 = vld [vmem:[%s2] sm:$0xff]
    %v71 = vld [vmem:[%s2 + $0x8] sm:$0xff]
    %v72 = vld [vmem:[%s2 + $0x10] sm:$0xff]
    %v73 = vld [vmem:[%s2 + $0x18] sm:$0xff]
    %vm74 = vcmask 261120
    %v76 = vsel %vm74, %v68, 0
    %v79 = vsel %vm74, %v69, 0
    %81 = vmatprep.subr.mxu0 0.0
    %82 = vmatpush1.msra.mxu0 %v70
    %83 = vmatprep.subr.mxu0 0.0
    %84 = vmatpush1.msra.mxu0 %v71
    %85 = vmatprep.subr.mxu0 0.0
    %86 = vmatpush1.msra.mxu0 %v72
    %87 = vmatprep.subr.mxu0 0.0
    %88 = vmatpush1.msra.mxu0 %v73
    %89 = vmatprep.subr.mxu0 0.0
    %90 = vmatpush1.msra.mxu0 0.0
    %91 = vmatprep.subr.mxu0 0.0
    %92 = vmatpush1.msra.mxu0 0.0
    %93 = vmatprep.subr.mxu0 0.0
    %94 = vmatpush1.msra.mxu0 0.0
    %95 = vmatprep.subr.mxu0 0.0
    %96 = vmatpush1.msra.mxu0 0.0
    %97 = vmatprep.subr.mxu0 0.0
    %98 = vmatpush1.msra.mxu0 0.0
    %99 = vmatprep.subr.mxu0 0.0
    %100 = vmatpush1.msra.mxu0 0.0
    %101 = vmatprep.subr.mxu0 0.0
    %102 = vmatpush1.msra.mxu0 0.0
    %103 = vmatprep.subr.mxu0 0.0
    %104 = vmatpush1.msra.mxu0 0.0
    %105 = vmatprep.subr.mxu0 0.0
    %106 = vmatpush1.msra.mxu0 0.0
    %107 = vmatprep.subr.mxu0 0.0
    %108 = vmatpush1.msra.mxu0 0.0
    %109 = vmatprep.subr.mxu0 0.0
    %110 = vmatpush1.msra.mxu0 0.0
    %111 = vmatprep.subr.mxu0 0.0
    %112 = vmatpush1.msra.mxu0 0.0
    %113 = vmatprep.subr.mxu0 0.0
    %114 = vmatpush1.msra.mxu0 0.0
    %115 = vmatprep.subr.mxu0 0.0
    %116 = vmatpush1.msra.mxu0 0.0
    %117 = vmatprep.subr.mxu0 0.0
    %118 = vmatpush1.msra.mxu0 0.0
    %119 = vmatprep.subr.mxu0 0.0
    %120 = vmatpush1.msra.mxu0 0.0
    %121 = vmatprep.subr.mxu0 0.0
    %122 = vmatpush1.msra.mxu0 0.0
    %123 = vmatprep.subr.mxu0 0.0
    %124 = vmatpush1.msra.mxu0 0.0
    %125 = vmatprep.subr.mxu0 0.0
    %126 = vmatpush1.msra.mxu0 0.0
    %127 = vmatprep.subr.mxu0 0.0
    %128 = vmatpush1.msra.mxu0 0.0
    %129 = vmatprep.subr.mxu0 0.0
    %130 = vmatpush1.msra.mxu0 0.0
    %131 = vmatprep.subr.mxu0 0.0
    %132 = vmatpush1.msra.mxu0 0.0
    %133 = vmatprep.subr.mxu0 0.0
    %134 = vmatpush1.msra.mxu0 0.0
    %135 = vmatprep.subr.mxu0 0.0
    %136 = vmatpush1.msra.mxu0 0.0
    %137 = vmatprep.subr.mxu0 0.0
    %138 = vmatpush1.msra.mxu0 0.0
    %139 = vmatprep.subr.mxu0 0.0
    %140 = vmatpush1.msra.mxu0 0.0
    %141 = vmatprep.subr.mxu0 0.0
    %142 = vmatpush1.msra.mxu0 0.0
    %143 = vmatprep.subr.mxu0 0.0
    %144 = vmatpush1.msra.mxu0 0.0
    %145 = vmatprep.mubr.f32.mxu0 0.0
    %146 = vmatmul.mubr.f32.gmra.mrb[0].mxu0 %v76
    %v147 = vpop.f32.mrb[0].mxu0
    %v148 = vadd.f32 0.0, %v147
    %v149 = vpop.f32.mrb[0].mxu0
    %150 = vmatprep.mubr.f32.mxu0 0.0
    %151 = vmatmul.mubr.f32.gmra.mrb[0].mxu0 %v79
    %v152 = vpop.f32.mrb[0].mxu0
    %v153 = vadd.f32 0.0, %v152
    %v154 = vpop.f32.mrb[0].mxu0
    %155 = vdwg.mxu0
    %v156 = vld [vmem:[#allocation5] sm:$0xff]
    %v157 = vld [vmem:[#allocation5 + $0x8] sm:$0xff]
    %v158 = vld [vmem:[#allocation7] sm:$0xff]
    %v159 = vld [vmem:[#allocation7 + $0x8] sm:$0xff]
    %v160 = vld [vmem:[#allocation7 + $0x10] sm:$0xff]
    %v161 = vld [vmem:[#allocation7 + $0x18] sm:$0xff]
    %v163 = vsel %vm74, %v156, 0
    %v166 = vsel %vm74, %v157, 0
    %168 = vmatprep.subr.mxu0 0.0
    %169 = vmatpush1.msra.mxu0 %v158
    %170 = vmatprep.subr.mxu0 0.0
    %171 = vmatpush1.msra.mxu0 %v159
    %172 = vmatprep.subr.mxu0 0.0
    %173 = vmatpush1.msra.mxu0 %v160
    %174 = vmatprep.subr.mxu0 0.0
    %175 = vmatpush1.msra.mxu0 %v161
    %176 = vmatprep.subr.mxu0 0.0
    %177 = vmatpush1.msra.mxu0 0.0
    %178 = vmatprep.subr.mxu0 0.0
    %179 = vmatpush1.msra.mxu0 0.0
    %180 = vmatprep.subr.mxu0 0.0
    %181 = vmatpush1.msra.mxu0 0.0
    %182 = vmatprep.subr.mxu0 0.0
    %183 = vmatpush1.msra.mxu0 0.0
    %184 = vmatprep.subr.mxu0 0.0
    %185 = vmatpush1.msra.mxu0 0.0
    %186 = vmatprep.subr.mxu0 0.0
    %187 = vmatpush1.msra.mxu0 0.0
    %188 = vmatprep.subr.mxu0 0.0
    %189 = vmatpush1.msra.mxu0 0.0
    %190 = vmatprep.subr.mxu0 0.0
    %191 = vmatpush1.msra.mxu0 0.0
    %192 = vmatprep.subr.mxu0 0.0
    %193 = vmatpush1.msra.mxu0 0.0
    %194 = vmatprep.subr.mxu0 0.0
    %195 = vmatpush1.msra.mxu0 0.0
    %196 = vmatprep.subr.mxu0 0.0
    %197 = vmatpush1.msra.mxu0 0.0
    %198 = vmatprep.subr.mxu0 0.0
    %199 = vmatpush1.msra.mxu0 0.0
    %200 = vmatprep.subr.mxu0 0.0
    %201 = vmatpush1.msra.mxu0 0.0
    %202 = vmatprep.subr.mxu0 0.0
    %203 = vmatpush1.msra.mxu0 0.0
    %204 = vmatprep.subr.mxu0 0.0
    %205 = vmatpush1.msra.mxu0 0.0
    %206 = vmatprep.subr.mxu0 0.0
    %207 = vmatpush1.msra.mxu0 0.0
    %208 = vmatprep.subr.mxu0 0.0
    %209 = vmatpush1.msra.mxu0 0.0
    %210 = vmatprep.subr.mxu0 0.0
    %211 = vmatpush1.msra.mxu0 0.0
    %212 = vmatprep.subr.mxu0 0.0
    %213 = vmatpush1.msra.mxu0 0.0
    %214 = vmatprep.subr.mxu0 0.0
    %215 = vmatpush1.msra.mxu0 0.0
    %216 = vmatprep.subr.mxu0 0.0
    %217 = vmatpush1.msra.mxu0 0.0
    %218 = vmatprep.subr.mxu0 0.0
    %219 = vmatpush1.msra.mxu0 0.0
    %220 = vmatprep.subr.mxu0 0.0
    %221 = vmatpush1.msra.mxu0 0.0
    %222 = vmatprep.subr.mxu0 0.0
    %223 = vmatpush1.msra.mxu0 0.0
    %224 = vmatprep.subr.mxu0 0.0
    %225 = vmatpush1.msra.mxu0 0.0
    %226 = vmatprep.subr.mxu0 0.0
    %227 = vmatpush1.msra.mxu0 0.0
    %228 = vmatprep.subr.mxu0 0.0
    %229 = vmatpush1.msra.mxu0 0.0
    %230 = vmatprep.subr.mxu0 0.0
    %231 = vmatpush1.msra.mxu0 0.0
    %232 = vmatprep.mubr.f32.mxu0 0.0
    %233 = vmatmul.mubr.f32.gmra.mrb[0].mxu0 %v163
    %v234 = vpop.f32.mrb[0].mxu0
    %v235 = vadd.f32 0.0, %v234
    %v236 = vpop.f32.mrb[0].mxu0
    %237 = vmatprep.mubr.f32.mxu0 0.0
    %238 = vmatmul.mubr.f32.gmra.mrb[0].mxu0 %v166
    %v239 = vpop.f32.mrb[0].mxu0
    %v240 = vadd.f32 0.0, %v239
    %v241 = vpop.f32.mrb[0].mxu0
    %242 = vdwg.mxu0
    %v243 = vld [vmem:[#allocation2] sm:$0xff]
    %v244 = vld [vmem:[#allocation2 + $0x8] sm:$0xff]
    %v245 = vmul.f32 %v148, %v235
    %v246 = vmul.f32 %v153, %v240
    %v247 = vld [vmem:[%s4] sm:$0xff]
    %v248 = vld [vmem:[%s4 + $0x8] sm:$0xff]
    %v249 = vld [vmem:[%s4 + $0x10] sm:$0xff]
    %v250 = vld [vmem:[%s4 + $0x18] sm:$0xff]
    %v252 = vsel %vm74, %v245, 0
    %v255 = vsel %vm74, %v246, 0
    %257 = vmatprep.subr.mxu0 0.0
    %258 = vmatpush1.msra.mxu0 %v247
    %259 = vmatprep.subr.mxu0 0.0
    %260 = vmatpush1.msra.mxu0 %v248
    %261 = vmatprep.subr.mxu0 0.0
    %262 = vmatpush1.msra.mxu0 %v249
    %263 = vmatprep.subr.mxu0 0.0
    %264 = vmatpush1.msra.mxu0 %v250
    %265 = vmatprep.subr.mxu0 0.0
    %266 = vmatpush1.msra.mxu0 0.0
    %267 = vmatprep.subr.mxu0 0.0
    %268 = vmatpush1.msra.mxu0 0.0
    %269 = vmatprep.subr.mxu0 0.0
    %270 = vmatpush1.msra.mxu0 0.0
    %271 = vmatprep.subr.mxu0 0.0
    %272 = vmatpush1.msra.mxu0 0.0
    %273 = vmatprep.subr.mxu0 0.0
    %274 = vmatpush1.msra.mxu0 0.0
    %275 = vmatprep.subr.mxu0 0.0
    %276 = vmatpush1.msra.mxu0 0.0
    %277 = vmatprep.subr.mxu0 0.0
    %278 = vmatpush1.msra.mxu0 0.0
    %279 = vmatprep.subr.mxu0 0.0
    %280 = vmatpush1.msra.mxu0 0.0
    %281 = vmatprep.subr.mxu0 0.0
    %282 = vmatpush1.msra.mxu0 0.0
    %283 = vmatprep.subr.mxu0 0.0
    %284 = vmatpush1.msra.mxu0 0.0
    %285 = vmatprep.subr.mxu0 0.0
    %286 = vmatpush1.msra.mxu0 0.0
    %287 = vmatprep.subr.mxu0 0.0
    %288 = vmatpush1.msra.mxu0 0.0
    %289 = vmatprep.subr.mxu0 0.0
    %290 = vmatpush1.msra.mxu0 0.0
    %291 = vmatprep.subr.mxu0 0.0
    %292 = vmatpush1.msra.mxu0 0.0
    %293 = vmatprep.subr.mxu0 0.0
    %294 = vmatpush1.msra.mxu0 0.0
    %295 = vmatprep.subr.mxu0 0.0
    %296 = vmatpush1.msra.mxu0 0.0
    %297 = vmatprep.subr.mxu0 0.0
    %298 = vmatpush1.msra.mxu0 0.0
    %299 = vmatprep.subr.mxu0 0.0
    %300 = vmatpush1.msra.mxu0 0.0
    %301 = vmatprep.subr.mxu0 0.0
    %302 = vmatpush1.msra.mxu0 0.0
    %303 = vmatprep.subr.mxu0 0.0
    %304 = vmatpush1.msra.mxu0 0.0
    %305 = vmatprep.subr.mxu0 0.0
    %306 = vmatpush1.msra.mxu0 0.0
    %307 = vmatprep.subr.mxu0 0.0
    %308 = vmatpush1.msra.mxu0 0.0
    %309 = vmatprep.subr.mxu0 0.0
    %310 = vmatpush1.msra.mxu0 0.0
    %311 = vmatprep.subr.mxu0 0.0
    %312 = vmatpush1.msra.mxu0 0.0
    %313 = vmatprep.subr.mxu0 0.0
    %314 = vmatpush1.msra.mxu0 0.0
    %315 = vmatprep.subr.mxu0 0.0
    %316 = vmatpush1.msra.mxu0 0.0
    %317 = vmatprep.subr.mxu0 0.0
    %318 = vmatpush1.msra.mxu0 0.0
    %319 = vmatprep.subr.mxu0 0.0
    %320 = vmatpush1.msra.mxu0 0.0
    %321 = vmatprep.mubr.f32.mxu0 0.0
    %322 = vmatmul.mubr.f32.gmra.mrb[0].mxu0 %v252
    %v323 = vpop.f32.mrb[0].mxu0
    %v324 = vadd.f32 0.0, %v323
    %v325 = vpop.f32.mrb[0].mxu0
    %326 = vmatprep.mubr.f32.mxu0 0.0
    %327 = vmatmul.mubr.f32.gmra.mrb[0].mxu0 %v255
    %v328 = vpop.f32.mrb[0].mxu0
    %v329 = vadd.f32 0.0, %v328
    %v330 = vpop.f32.mrb[0].mxu0
    %331 = vdwg.mxu0
    %v332 = vadd.f32 %v243, %v324
    %v333 = vadd.f32 %v244, %v329
    %vm334 = vcmask 31744
    %335 = vst.msk [vmem:[#allocation2] sm:$0xff] %vm334, %v332
    %336 = vst.msk [vmem:[#allocation2 + $0x8] sm:$0xff] %vm334, %v333
    // Predicated region
    $region38: #{tpu_custom_call.1} parent=1 // pred_check
      %p337 = pneg %p61
    $region39: #{tpu_custom_call.1} parent=1 // pred_check_branch
      %339 = sbr.rel (%p337) target = $region41
    $region40: #{tpu_custom_call.1} parent=1 // pred_region
      %v340 = vld [vmem:[#allocation2] sm:$0xff]
      %v341 = vld [vmem:[#allocation2 + $0x8] sm:$0xff]
      %342 = vst.msk [vmem:[%s5] sm:$0xff] %vm334, %v340
      %343 = vst.msk [vmem:[%s5 + $0x8] sm:$0xff] %vm334, %v341
    $region41: #{tpu_custom_call.1} parent=1 // pred_fallthru
      _
    // Predicated region
    $region42: #{tpu_custom_call.1} parent=1 // pred_check
      _
    $region43: #{tpu_custom_call.1} parent=1 // pred_check_branch
      %345 = sbr.rel (0) target = $region45
    $region44: #{tpu_custom_call.1} parent=1 // pred_region
      _
    $region45: #{tpu_custom_call.1} parent=1 // pred_fallthru
      _
    // Predicated region
    $region46: #{tpu_custom_call.1} parent=1 // pred_check
      _
    $region47: #{tpu_custom_call.1} parent=1 // pred_check_branch
      %347 = sbr.rel (0) target = $region49
    $region48: #{tpu_custom_call.1} parent=1 // pred_region
      _
    $region49: #{tpu_custom_call.1} parent=1 // pred_fallthru
      _
    %348 = vsyncpa [#allocation4], 1
    %349 = vsyncpa [#allocation6], 1

</llo_original>
